<compile_context>
chip_gen: v6e
topology: v6e:2x2x1
jax: 0.10.0
libtpu: 0.0.40
codegen_flags: <defaults>
</compile_context>

<pallas_src>
import jax
import jax.numpy as jnp
from jax import lax
from jax.experimental import pallas as pl
from jax.experimental.pallas import tpu as pltpu


_NC_PAD = 128                  # one-hot class axis padded to a full lane width
_TB_MAX = 4096                 # max batch tile (multiple of 128)
_VMEM_BUDGET = 12 * 1024 * 1024  # conservative double-buffered input budget


def _round_up(x, m):
    return (x + m - 1) // m * m


def _small_params(sp_ref):
    """Static slices of the packed (8,128) small-parameter slab (free)."""
    b1 = sp_ref[0:1, 0:64]     # fc1 bias        (1, 64)
    b2 = sp_ref[1:2, 0:32]     # fc2 bias        (1, 32)
    w3t = sp_ref[2:3, 0:32]    # fc3 weight      (1, 32)  [out, in]
    b3 = sp_ref[3:4, 0:1]      # fc3 bias        (1, 1)
    return b1, b2, w3t, b3


def _mlp_tail(h1, w2, b2, w3t, b3):
    """relu(fc2) -> fc3 (lane-dense, transposed) -> sigmoid.  Returns (1, tb)."""
    h2 = jnp.maximum(
        jnp.dot(h1, w2, preferred_element_type=jnp.float32) + b2, 0.0)   # (tb, 32)
    # z^T = w3 @ h2^T : contract the minor (feature) dims of both operands so the
    # result is already lane-dense (1, tb); no in-kernel transpose of h2 needed.
    zt = lax.dot_general(w3t, h2, (((1,), (1,)), ((), ())),
                         preferred_element_type=jnp.float32) + b3        # (1, tb)
    return jax.nn.sigmoid(zt)


def _disc_kernel_discrete(state_ref, act_ref, w1s_ref, tab_ref, w2_ref, sp_ref,
                          o_ref):
    # act_ref: (tb, 1) int32 raw class indices.
    # tab_ref: (_NC_PAD, 64) f32 = [W1_action + b1 ; zeros]  (b1 pre-folded).
    _, b2, w3t, b3 = _small_params(sp_ref)
    tb = act_ref.shape[0]
    classes = lax.broadcasted_iota(jnp.int32, (tb, _NC_PAD), 1)
    onehot = (act_ref[...] == classes).astype(jnp.float32)               # (tb, 128)
    h1 = jnp.maximum(
        jnp.dot(state_ref[...], w1s_ref[...], preferred_element_type=jnp.float32)
        + jnp.dot(onehot, tab_ref[...], preferred_element_type=jnp.float32),
        0.0)                                                             # (tb, 64)
    o_ref[...] = _mlp_tail(h1, w2_ref[...], b2, w3t, b3)


def _disc_kernel_dense(state_ref, act_ref, w1s_ref, w1a_ref, w2_ref, sp_ref,
                       o_ref):
    # Continuous-action path: fc1 split into two matmuls (== concat + fc1).
    b1, b2, w3t, b3 = _small_params(sp_ref)
    h1 = jnp.maximum(
        jnp.dot(state_ref[...], w1s_ref[...], preferred_element_type=jnp.float32)
        + jnp.dot(act_ref[...], w1a_ref[...], preferred_element_type=jnp.float32)
        + b1, 0.0)                                                       # (tb, 64)
    o_ref[...] = _mlp_tail(h1, w2_ref[...], b2, w3t, b3)


def discriminator_forward(state, action, params):
    """Forward pass matching Discriminator.forward semantics.

    state:  f32[B, state_dim]
    action: f32[B, action_dim]  OR  int[B] (the PyTorch `action.dim() == 1`
            branch: one-hot to 10 classes, computed in-kernel from raw indices).
    Returns f32[B, 1].
    """
    w1s, w1a, b1, w2, b2, w3, b3 = params
    state = state.astype(jnp.float32)
    B, sd = state.shape

    # Pack all sub-(8,128) parameters into one (8,128) f32 slab (one operand).
    sp = jnp.zeros((8, 128), jnp.float32)
    sp = sp.at[0, :64].set(b1)
    sp = sp.at[1, :32].set(b2)
    sp = sp.at[2, :32].set(w3.reshape(-1))
    sp = sp.at[3, 0].set(b3.reshape(-1)[0])

    discrete = action.ndim == 1
    if discrete:
        # Raw indices streamed (4 B/row); one-hot + gather happen in-kernel.
        # b1 is folded into the class table.  NOTE: out-of-range indices give a
        # zero contribution here, whereas PyTorch's F.one_hot would raise.
        act_in = action.reshape(B, 1).astype(jnp.int32)
        nc = w1a.shape[0]  # == action_dim (torch spec requires 10 here)
        tab = jnp.zeros((_NC_PAD, 64), jnp.float32).at[:nc].set(w1a + b1[None, :])
        kernel = _disc_kernel_discrete
        w_ops = (w1s, tab, w2, sp)
    else:
        act_in = action.astype(jnp.float32)
        kernel = _disc_kernel_dense
        w_ops = (w1s, w1a, w2, sp)
    ad = act_in.shape[1]

    # ---- batch tiling (no wrapper-side padding; Pallas masks partial blocks).
    if B <= 512:
        tb, grid = B, 1                      # full-array blocks: always legal
    else:
        # VMEM footprint of the streamed tiles accounts for lane padding of
        # narrow operands (last dim rounds up to 128 lanes in VMEM).
        row_bytes = 4 * (_round_up(sd, 128) + _round_up(ad, 128))
        tb_cap = max(128, (_VMEM_BUDGET // (2 * row_bytes)) // 128 * 128)
        # >= 2 tiles so both v7x TensorCores get work; 128-aligned, capped.
        tb = min(_round_up(pl.cdiv(B, 2), 128), _TB_MAX, tb_cap)
        grid = pl.cdiv(B, tb)

    batched = lambda d: pl.BlockSpec((tb, d), lambda i: (i, 0))
    full = lambda a: pl.BlockSpec(a.shape, lambda i: (0, 0))
    in_specs = [batched(sd), batched(ad)] + [full(w) for w in w_ops]

    flops = 2 * B * (sd * 64 + (_NC_PAD if discrete else ad) * 64 + 64 * 32 + 32)
    w_bytes = sum(4 * int(w.size) for w in w_ops)
    io_bytes = 4 * B * (sd + (1 if discrete else ad) + 1) + w_bytes
    cost = pl.CostEstimate(flops=int(flops), transcendentals=int(B),
                           bytes_accessed=int(io_bytes))

    out = pl.pallas_call(
        kernel,
        out_shape=jax.ShapeDtypeStruct((1, B), jnp.float32),
        grid=(grid,),
        in_specs=in_specs,
        # Lane-dense output slab: batch on the lane axis.
        out_specs=pl.BlockSpec((1, tb), lambda i: (0, i)),
        compiler_params=pltpu.CompilerParams(
            dimension_semantics=("parallel",)),
        cost_estimate=cost,
    )(state, act_in, *w_ops)

    return out[0].reshape(B, 1)


def init_params(state_dim, action_dim, key):
    """PyTorch-style uniform(-1/sqrt(fan_in), 1/sqrt(fan_in)) init.

    W1 is stored pre-split into (W1_state [sd,64], W1_action [ad,64]); fc3's
    weight is stored as [out, in] = [1, 32] (lane-dense fc3, no transpose).
    """
    d_in = state_dim + action_dim

    def unif(k, shape, fan_in):
        bound = 1.0 / jnp.sqrt(jnp.float32(fan_in))
        return jax.random.uniform(k, shape, jnp.float32, -bound, bound)

    ks = jax.random.split(key, 6)
    w1 = unif(ks[0], (d_in, 64), d_in)
    b1 = unif(ks[1], (64,), d_in)
    w2 = unif(ks[2], (64, 32), 64)
    b2 = unif(ks[3], (32,), 64)
    w3 = unif(ks[4], (1, 32), 32)
    b3 = unif(ks[5], (1,), 32)
    return (w1[:state_dim], w1[state_dim:], b1, w2, b2, w3, b3)


def _reference_forward(state, action, params):
    # Pure-JAX reference (mirrors the PyTorch module exactly).
    w1s, w1a, b1, w2, b2, w3, b3 = params
    if action.ndim == 1:
        action = jax.nn.one_hot(action.astype(jnp.int32), 10, dtype=jnp.float32)
    x = jnp.concatenate([state.astype(jnp.float32), action], axis=1)
    w1 = jnp.concatenate([w1s, w1a], axis=0)
    hp = lax.Precision.HIGHEST
    h1 = jnp.maximum(jnp.dot(x, w1, precision=hp) + b1, 0.0)
    h2 = jnp.maximum(jnp.dot(h1, w2, precision=hp) + b2, 0.0)
    return jax.nn.sigmoid(jnp.dot(h2, w3.T, precision=hp) + b3)


if __name__ == "__main__":
    state_dim, action_dim = 8, 10
    root = jax.random.PRNGKey(0)
    kp, ks1, ka1, kc1, ks2, ka2, kc2 = jax.random.split(root, 7)
    params = init_params(state_dim, action_dim, kp)
    fwd = jax.jit(discriminator_forward)

    # --- small batch, discrete-action branch (int actions -> in-kernel one-hot)
    B = 8
    state = jax.random.normal(ks1, (B, state_dim), jnp.float32)
    act_d = jax.random.randint(ka1, (B,), 0, 10)
    out = jax.block_until_ready(fwd(state, act_d, params))
    ref = _reference_forward(state, act_d, params)
    assert out.shape == (B, 1)
    assert jnp.allclose(out, ref, atol=1e-5, rtol=1e-5)

    # --- small batch, continuous-action branch
    act_c = jax.random.normal(kc1, (B, action_dim), jnp.float32)
    out = jax.block_until_ready(fwd(state, act_c, params))
    ref = _reference_forward(state, act_c, params)
    assert out.shape == (B, 1)
    assert jnp.allclose(out, ref, atol=1e-5, rtol=1e-5)

    # --- larger batch: exercises the 2-tile parallel grid + masked partial block
    B = 700
    state = jax.random.normal(ks2, (B, state_dim), jnp.float32)
    act_d = jax.random.randint(ka2, (B,), 0, 10)
    out = jax.block_until_ready(fwd(state, act_d, params))
    ref = _reference_forward(state, act_d, params)
    assert out.shape == (B, 1)
    assert jnp.allclose(out, ref, atol=1e-5, rtol=1e-5)

    act_c = jax.random.normal(kc2, (B, action_dim), jnp.float32)
    out = jax.block_until_ready(fwd(state, act_c, params))
    ref = _reference_forward(state, act_c, params)
    assert out.shape == (B, 1)
    assert jnp.allclose(out, ref, atol=1e-5, rtol=1e-5)

    print("KERNEL_OK")
</pallas_src>

<mosaic_0001>
module attributes {stable_mosaic.version = 11 : i64} {
  func.func @_disc_kernel_discrete(%arg0: i32, %arg1: memref<8x8xf32, #tpu.memory_space<vmem>>, %arg2: memref<8x1xi32, #tpu.memory_space<vmem>>, %arg3: memref<8x64xf32, #tpu.memory_space<vmem>>, %arg4: memref<128x64xf32, #tpu.memory_space<vmem>>, %arg5: memref<64x32xf32, #tpu.memory_space<vmem>>, %arg6: memref<8x128xf32, #tpu.memory_space<vmem>>, %arg7: memref<1x8xf32, #tpu.memory_space<vmem>>) attributes {dimension_semantics = [#tpu.dimension_semantics<parallel>], iteration_bounds = array<i64: 1>, scalar_prefetch = 0 : i64, scratch_operands = 0 : i64, tpu.core_type = #tpu.core_type<tc>, window_params = [{transform_indices = @transform_0, window_bounds = array<i64: 8, 8>}, {transform_indices = @transform_1, window_bounds = array<i64: 8, 1>}, {pipeline_mode = #tpu.pipeline_mode<synchronous>, transform_indices = @transform_2, window_bounds = array<i64: 8, 64>}, {pipeline_mode = #tpu.pipeline_mode<synchronous>, transform_indices = @transform_3, window_bounds = array<i64: 128, 64>}, {pipeline_mode = #tpu.pipeline_mode<synchronous>, transform_indices = @transform_4, window_bounds = array<i64: 64, 32>}, {pipeline_mode = #tpu.pipeline_mode<synchronous>, transform_indices = @transform_5, window_bounds = array<i64: 8, 128>}, {transform_indices = @transform_6, window_bounds = array<i64: 1, 8>}]} {
    %c1 = arith.constant 1 : index
    %c0 = arith.constant 0 : index
    %0 = vector.load %arg6[%c1, %c0] : memref<8x128xf32, #tpu.memory_space<vmem>>, vector<1x32xf32>
    %c2 = arith.constant 2 : index
    %c0_0 = arith.constant 0 : index
    %1 = vector.load %arg6[%c2, %c0_0] : memref<8x128xf32, #tpu.memory_space<vmem>>, vector<1x32xf32>
    %c3 = arith.constant 3 : index
    %c0_1 = arith.constant 0 : index
    %2 = vector.load %arg6[%c3, %c0_1] : memref<8x128xf32, #tpu.memory_space<vmem>>, vector<1x1xf32>
    %3 = tpu.iota {dimensions = array<i32: 1>} : vector<8x128xi32>
    %c0_2 = arith.constant 0 : index
    %c0_3 = arith.constant 0 : index
    %4 = vector.load %arg2[%c0_2, %c0_3] : memref<8x1xi32, #tpu.memory_space<vmem>>, vector<8x1xi32>
    %5 = vector.broadcast %4 : vector<8x1xi32> to vector<8x128xi32>
    %6 = arith.cmpi eq, %5, %3 : vector<8x128xi32>
    %7 = arith.extui %6 : vector<8x128xi1> to vector<8x128xi32>
    %8 = arith.sitofp %7 : vector<8x128xi32> to vector<8x128xf32>
    %c0_4 = arith.constant 0 : index
    %c0_5 = arith.constant 0 : index
    %9 = vector.load %arg1[%c0_4, %c0_5] : memref<8x8xf32, #tpu.memory_space<vmem>>, vector<8x8xf32>
    %c0_6 = arith.constant 0 : index
    %c0_7 = arith.constant 0 : index
    %10 = vector.load %arg3[%c0_6, %c0_7] : memref<8x64xf32, #tpu.memory_space<vmem>>, vector<8x64xf32>
    %cst = arith.constant dense<0.000000e+00> : vector<8x64xf32>
    %11 = tpu.matmul %9, %10, %cst {dimension_numbers = #tpu.dot_dimension_numbers<[1], [0], [0], [1], [0, 0, 1, 1], [], []>} : vector<8x8xf32>, vector<8x64xf32>, vector<8x64xf32> -> vector<8x64xf32>
    %c0_8 = arith.constant 0 : index
    %c0_9 = arith.constant 0 : index
    %12 = vector.load %arg4[%c0_8, %c0_9] : memref<128x64xf32, #tpu.memory_space<vmem>>, vector<128x64xf32>
    %cst_10 = arith.constant dense<0.000000e+00> : vector<8x64xf32>
    %13 = tpu.matmul %8, %12, %cst_10 {dimension_numbers = #tpu.dot_dimension_numbers<[1], [0], [0], [1], [0, 0, 1, 1], [], []>} : vector<8x128xf32>, vector<128x64xf32>, vector<8x64xf32> -> vector<8x64xf32>
    %14 = arith.addf %11, %13 : vector<8x64xf32>
    %cst_11 = arith.constant 0.000000e+00 : f32
    %15 = vector.broadcast %cst_11 : f32 to vector<8x64xf32>
    %16 = arith.maximumf %14, %15 : vector<8x64xf32>
    %c0_12 = arith.constant 0 : index
    %c0_13 = arith.constant 0 : index
    %17 = vector.load %arg5[%c0_12, %c0_13] : memref<64x32xf32, #tpu.memory_space<vmem>>, vector<64x32xf32>
    %cst_14 = arith.constant dense<0.000000e+00> : vector<8x32xf32>
    %18 = tpu.matmul %16, %17, %cst_14 {dimension_numbers = #tpu.dot_dimension_numbers<[1], [0], [0], [1], [0, 0, 1, 1], [], []>} : vector<8x64xf32>, vector<64x32xf32>, vector<8x32xf32> -> vector<8x32xf32>
    %19 = vector.broadcast %0 : vector<1x32xf32> to vector<8x32xf32>
    %20 = arith.addf %18, %19 : vector<8x32xf32>
    %cst_15 = arith.constant 0.000000e+00 : f32
    %21 = vector.broadcast %cst_15 : f32 to vector<8x32xf32>
    %22 = arith.maximumf %20, %21 : vector<8x32xf32>
    %cst_16 = arith.constant dense<0.000000e+00> : vector<1x8xf32>
    %23 = tpu.matmul %1, %22, %cst_16 {dimension_numbers = #tpu.dot_dimension_numbers<[1], [1], [0], [0], [0, 0, 1, 0], [], []>} : vector<1x32xf32>, vector<8x32xf32>, vector<1x8xf32> -> vector<1x8xf32>
    %24 = vector.broadcast %2 : vector<1x1xf32> to vector<1x8xf32>
    %25 = arith.addf %23, %24 : vector<1x8xf32>
    %26 = arith.negf %25 : vector<1x8xf32>
    %27 = math.exp %26 : vector<1x8xf32>
    %cst_17 = arith.constant 1.000000e+00 : f32
    %28 = vector.broadcast %cst_17 : f32 to vector<1x8xf32>
    %29 = arith.addf %28, %27 : vector<1x8xf32>
    %30 = arith.divf %28, %29 : vector<1x8xf32>
    %c0_18 = arith.constant 0 : index
    %c0_19 = arith.constant 0 : index
    %31 = vector.load %arg7[%c0_18, %c0_19] : memref<1x8xf32, #tpu.memory_space<vmem>>, vector<1x8xf32>
    tpu.vector_store %arg7[%c0_18, %c0_19], %30 {strides = array<i32>} : memref<1x8xf32, #tpu.memory_space<vmem>>, vector<1x8xf32>,
    return
  }
  func.func @transform_0(%arg0: i32) -> (i32, i32) {
    %c0_i32 = arith.constant 0 : i32
    %c0_i32_0 = arith.constant 0 : i32
    return %arg0, %c0_i32 : i32, i32
  }
  func.func @transform_1(%arg0: i32) -> (i32, i32) {
    %c0_i32 = arith.constant 0 : i32
    %c0_i32_0 = arith.constant 0 : i32
    return %arg0, %c0_i32 : i32, i32
  }
  func.func @transform_2(%arg0: i32) -> (i32, i32) {
    %c0_i32 = arith.constant 0 : i32
    %c0_i32_0 = arith.constant 0 : i32
    %c0_i32_1 = arith.constant 0 : i32
    return %c0_i32, %c0_i32_0 : i32, i32
  }
  func.func @transform_3(%arg0: i32) -> (i32, i32) {
    %c0_i32 = arith.constant 0 : i32
    %c0_i32_0 = arith.constant 0 : i32
    %c0_i32_1 = arith.constant 0 : i32
    return %c0_i32, %c0_i32_0 : i32, i32
  }
  func.func @transform_4(%arg0: i32) -> (i32, i32) {
    %c0_i32 = arith.constant 0 : i32
    %c0_i32_0 = arith.constant 0 : i32
    %c0_i32_1 = arith.constant 0 : i32
    return %c0_i32, %c0_i32_0 : i32, i32
  }
  func.func @transform_5(%arg0: i32) -> (i32, i32) {
    %c0_i32 = arith.constant 0 : i32
    %c0_i32_0 = arith.constant 0 : i32
    %c0_i32_1 = arith.constant 0 : i32
    return %c0_i32, %c0_i32_0 : i32, i32
  }
  func.func @transform_6(%arg0: i32) -> (i32, i32) {
    %c0_i32 = arith.constant 0 : i32
    %c0_i32_0 = arith.constant 0 : i32
    return %c0_i32, %arg0 : i32, i32
  }
}

</mosaic_0001>

<llo_original>
// kernel: discriminator_forward.1
$region0: #{discriminator_forward.1}
  #allocation0 [shape = 'u32[]', space=smem, size = 0x4, offset = 0x4, fixed_abs, tag = 'smem constant byte address 0x4 - core index']
  #allocation1 [shape = 'u32[144,128]{1,0:T(1,128)}', space=vmem, size = 0x12000, scoped, tag = 'internal scratch']
  %s0 = inlined_call_operand.vmem [shape: f32[8,8], index: 0, kind: input, shape index: {}]
  %s1 = inlined_call_operand.vmem [shape: s32[8,1], index: 1, kind: input, shape index: {}]
  %s2 = inlined_call_operand.vmem [shape: f32[8,64], index: 2, kind: input, shape index: {}]
  %s3 = inlined_call_operand.vmem [shape: f32[128,64], index: 3, kind: input, shape index: {}]
  %s4 = inlined_call_operand.vmem [shape: f32[64,32], index: 4, kind: input, shape index: {}]
  %s5 = inlined_call_operand.vmem [shape: f32[8,128], index: 5, kind: input, shape index: {}]
  %s6 = inlined_call_operand.hbm [shape: f32[1,8], index: 6, kind: output, shape index: {}]
  %s7 = sld [smem:[#allocation0]]
  $region34: #{discriminator_forward.1} parent=0
    _
  %s9 = ssub.s32 1, %s7
  %s10 = scalar_select 0, %s9, %s7
  $region1: #{discriminator_forward.1} parent=0
    #allocation2 [shape = 'u8[512]{0}', space=vmem, size = 0x400, scoped, tag = 'output window, operand 0, single buffered']
    #allocation3 [shape = 's32[1]{0}', space=sflag, size = 0x4, scoped, tag = 'scoped memory for discriminator_forward.1']
    %11 = vsyncpa [#allocation3], 0
    // Predicated region
    $region2: #{discriminator_forward.1} parent=1 // pred_check
      _
    $region3: #{discriminator_forward.1} parent=1 // pred_check_branch
      %13 = sbr.rel (0) target = $region5
    $region4: #{discriminator_forward.1} parent=1 // pred_region
      _
    $region5: #{discriminator_forward.1} parent=1 // pred_fallthru
      _
    // Predicated region
    $region6: #{discriminator_forward.1} parent=1 // pred_check
      _
    $region7: #{discriminator_forward.1} parent=1 // pred_check_branch
      %15 = sbr.rel (0) target = $region9
    $region8: #{discriminator_forward.1} parent=1 // pred_region
      _
    $region9: #{discriminator_forward.1} parent=1 // pred_fallthru
      _
    // Predicated region
    $region10: #{discriminator_forward.1} parent=1 // pred_check
      _
    $region11: #{discriminator_forward.1} parent=1 // pred_check_branch
      %17 = sbr.rel (0) target = $region13
    $region12: #{discriminator_forward.1} parent=1 // pred_region
      _
    $region13: #{discriminator_forward.1} parent=1 // pred_fallthru
      _
    // Predicated region
    $region14: #{discriminator_forward.1} parent=1 // pred_check
      _
    $region15: #{discriminator_forward.1} parent=1 // pred_check_branch
      %19 = sbr.rel (0) target = $region17
    $region16: #{discriminator_forward.1} parent=1 // pred_region
      _
    $region17: #{discriminator_forward.1} parent=1 // pred_fallthru
      _
    // Predicated region
    $region18: #{discriminator_forward.1} parent=1 // pred_check
      _
    $region19: #{discriminator_forward.1} parent=1 // pred_check_branch
      %21 = sbr.rel (0) target = $region21
    $region20: #{discriminator_forward.1} parent=1 // pred_region
      _
    $region21: #{discriminator_forward.1} parent=1 // pred_fallthru
      _
    // Predicated region
    $region22: #{discriminator_forward.1} parent=1 // pred_check
      _
    $region23: #{discriminator_forward.1} parent=1 // pred_check_branch
      %23 = sbr.rel (0) target = $region25
    $region24: #{discriminator_forward.1} parent=1 // pred_region
      _
    $region25: #{discriminator_forward.1} parent=1 // pred_fallthru
      _
    %v24 = vld [vmem:[%s5 + $0x1] sm:$0x1]
    %v25 = vld [vmem:[%s5 + $0x2] sm:$0x1]
    %v26 = vld [vmem:[%s5 + $0x3] sm:$0x1]
    %v27 = vlaneseq
    %v28 = vand.u32 %v27, 127
    %v29 = vld [vmem:[%s1] sm:$0xff]
    %30 = vset.pattern.permute.xlu0 0
    %31 = vperm.xlu0 %30, %v29
    %v32 = vpop.permute.xlu0 %31
    %vm33 = vcmp.eq.s32.totalorder %v32, %v28
    %v34 = vsel %vm33, 1, 0
    %v35 = vcvt.s32.f32 %v34
    %v36 = vld [vmem:[%s0] sm:$0xff]
    %v37 = vld [vmem:[%s2] sm:$0xff]
    %v38 = vld [vmem:[%s3] sm:$0xff]
    %v39 = vld [vmem:[%s3 + $0x8] sm:$0xff]
    %v40 = vld [vmem:[%s3 + $0x10] sm:$0xff]
    %v41 = vld [vmem:[%s3 + $0x18] sm:$0xff]
    %v42 = vld [vmem:[%s3 + $0x20] sm:$0xff]
    %v43 = vld [vmem:[%s3 + $0x28] sm:$0xff]
    %v44 = vld [vmem:[%s3 + $0x30] sm:$0xff]
    %v45 = vld [vmem:[%s3 + $0x38] sm:$0xff]
    %v46 = vld [vmem:[%s3 + $0x40] sm:$0xff]
    %v47 = vld [vmem:[%s3 + $0x48] sm:$0xff]
    %v48 = vld [vmem:[%s3 + $0x50] sm:$0xff]
    %v49 = vld [vmem:[%s3 + $0x58] sm:$0xff]
    %v50 = vld [vmem:[%s3 + $0x60] sm:$0xff]
    %v51 = vld [vmem:[%s3 + $0x68] sm:$0xff]
    %v52 = vld [vmem:[%s3 + $0x70] sm:$0xff]
    %v53 = vld [vmem:[%s3 + $0x78] sm:$0xff]
    %54 = vmatprep.subr.mxu0 0.0
    %55 = vmatpush1.msra.mxu0 %v53
    %56 = vmatprep.subr.mxu0 0.0
    %57 = vmatpush1.msra.mxu0 %v52
    %58 = vmatprep.subr.mxu0 0.0
    %59 = vmatpush1.msra.mxu0 %v51
    %60 = vmatprep.subr.mxu0 0.0
    %61 = vmatpush1.msra.mxu0 %v50
    %62 = vmatprep.subr.mxu0 0.0
    %63 = vmatpush1.msra.mxu0 %v49
    %64 = vmatprep.subr.mxu0 0.0
    %65 = vmatpush1.msra.mxu0 %v48
    %66 = vmatprep.subr.mxu0 0.0
    %67 = vmatpush1.msra.mxu0 %v47
    %68 = vmatprep.subr.mxu0 0.0
    %69 = vmatpush1.msra.mxu0 %v46
    %70 = vmatprep.subr.mxu0 0.0
    %71 = vmatpush1.msra.mxu0 %v45
    %72 = vmatprep.subr.mxu0 0.0
    %73 = vmatpush1.msra.mxu0 %v44
    %74 = vmatprep.subr.mxu0 0.0
    %75 = vmatpush1.msra.mxu0 %v43
    %76 = vmatprep.subr.mxu0 0.0
    %77 = vmatpush1.msra.mxu0 %v42
    %78 = vmatprep.subr.mxu0 0.0
    %79 = vmatpush1.msra.mxu0 %v41
    %80 = vmatprep.subr.mxu0 0.0
    %81 = vmatpush1.msra.mxu0 %v40
    %82 = vmatprep.subr.mxu0 0.0
    %83 = vmatpush1.msra.mxu0 %v39
    %84 = vmatprep.subr.mxu0 0.0
    %85 = vmatpush1.msra.mxu0 %v38
    %86 = vmatprep.subr.mxu0 0.0
    %87 = vmatpush2.msra.mxu0 0.0
    %88 = vmatprep.subr.mxu0 0.0
    %89 = vmatpush2.msra.mxu0 0.0
    %90 = vmatprep.subr.mxu0 0.0
    %91 = vmatpush2.msra.mxu0 0.0
    %92 = vmatprep.subr.mxu0 0.0
    %93 = vmatpush2.msra.mxu0 0.0
    %94 = vmatprep.subr.mxu0 0.0
    %95 = vmatpush2.msra.mxu0 0.0
    %96 = vmatprep.subr.mxu0 0.0
    %97 = vmatpush2.msra.mxu0 0.0
    %98 = vmatprep.subr.mxu0 0.0
    %99 = vmatpush2.msra.mxu0 0.0
    %100 = vmatprep.subr.mxu0 0.0
    %101 = vmatpush2.msra.mxu0 0.0
    %102 = vmatprep.subr.mxu0 0.0
    %103 = vmatpush2.msra.mxu0 0.0
    %104 = vmatprep.subr.mxu0 0.0
    %105 = vmatpush2.msra.mxu0 0.0
    %106 = vmatprep.subr.mxu0 0.0
    %107 = vmatpush2.msra.mxu0 0.0
    %108 = vmatprep.subr.mxu0 0.0
    %109 = vmatpush2.msra.mxu0 0.0
    %110 = vmatprep.subr.mxu0 0.0
    %111 = vmatpush2.msra.mxu0 0.0
    %112 = vmatprep.subr.mxu0 0.0
    %113 = vmatpush2.msra.mxu0 0.0
    %114 = vmatprep.subr.mxu0 0.0
    %115 = vmatpush2.msra.mxu0 0.0
    %116 = vmatprep.subr.mxu0 0.0
    %117 = vmatpush2.msra.mxu0 0.0
    %118 = vmatprep.mubr.f32.mxu0 0.0
    %119 = vmatmul.mubr.f32.gmra.mxu0 %v35
    %v120 = vpop.f32.mrf.mxu0
    %v121 = vadd.f32 0.0, %v120
    %v122 = vpop.f32.mrf.mxu0
    %123 = vdwg.mxu0
    %vm124 = vcmask 64512
    %v126 = vsel %vm124, %v36, 0
    %128 = vmatprep.subr.mxu0 0.0
    %129 = vmatpush1.msra.mxu0 0.0
    %130 = vmatprep.subr.mxu0 0.0
    %131 = vmatpush1.msra.mxu0 0.0
    %132 = vmatprep.subr.mxu0 0.0
    %133 = vmatpush1.msra.mxu0 0.0
    %134 = vmatprep.subr.mxu0 0.0
    %135 = vmatpush1.msra.mxu0 0.0
    %136 = vmatprep.subr.mxu0 0.0
    %137 = vmatpush1.msra.mxu0 0.0
    %138 = vmatprep.subr.mxu0 0.0
    %139 = vmatpush1.msra.mxu0 0.0
    %140 = vmatprep.subr.mxu0 0.0
    %141 = vmatpush1.msra.mxu0 0.0
    %142 = vmatprep.subr.mxu0 0.0
    %143 = vmatpush1.msra.mxu0 0.0
    %144 = vmatprep.subr.mxu0 0.0
    %145 = vmatpush1.msra.mxu0 0.0
    %146 = vmatprep.subr.mxu0 0.0
    %147 = vmatpush1.msra.mxu0 0.0
    %148 = vmatprep.subr.mxu0 0.0
    %149 = vmatpush1.msra.mxu0 0.0
    %150 = vmatprep.subr.mxu0 0.0
    %151 = vmatpush1.msra.mxu0 0.0
    %152 = vmatprep.subr.mxu0 0.0
    %153 = vmatpush1.msra.mxu0 0.0
    %154 = vmatprep.subr.mxu0 0.0
    %155 = vmatpush1.msra.mxu0 0.0
    %156 = vmatprep.subr.mxu0 0.0
    %157 = vmatpush1.msra.mxu0 0.0
    %158 = vmatprep.subr.mxu0 0.0
    %159 = vmatpush1.msra.mxu0 %v37
    %160 = vmatprep.subr.mxu0 0.0
    %161 = vmatpush2.msra.mxu0 0.0
    %162 = vmatprep.subr.mxu0 0.0
    %163 = vmatpush2.msra.mxu0 0.0
    %164 = vmatprep.subr.mxu0 0.0
    %165 = vmatpush2.msra.mxu0 0.0
    %166 = vmatprep.subr.mxu0 0.0
    %167 = vmatpush2.msra.mxu0 0.0
    %168 = vmatprep.subr.mxu0 0.0
    %169 = vmatpush2.msra.mxu0 0.0
    %170 = vmatprep.subr.mxu0 0.0
    %171 = vmatpush2.msra.mxu0 0.0
    %172 = vmatprep.subr.mxu0 0.0
    %173 = vmatpush2.msra.mxu0 0.0
    %174 = vmatprep.subr.mxu0 0.0
    %175 = vmatpush2.msra.mxu0 0.0
    %176 = vmatprep.subr.mxu0 0.0
    %177 = vmatpush2.msra.mxu0 0.0
    %178 = vmatprep.subr.mxu0 0.0
    %179 = vmatpush2.msra.mxu0 0.0
    %180 = vmatprep.subr.mxu0 0.0
    %181 = vmatpush2.msra.mxu0 0.0
    %182 = vmatprep.subr.mxu0 0.0
    %183 = vmatpush2.msra.mxu0 0.0
    %184 = vmatprep.subr.mxu0 0.0
    %185 = vmatpush2.msra.mxu0 0.0
    %186 = vmatprep.subr.mxu0 0.0
    %187 = vmatpush2.msra.mxu0 0.0
    %188 = vmatprep.subr.mxu0 0.0
    %189 = vmatpush2.msra.mxu0 0.0
    %190 = vmatprep.subr.mxu0 0.0
    %191 = vmatpush2.msra.mxu0 0.0
    %192 = vmatprep.mubr.f32.mxu0 0.0
    %193 = vmatmul.mubr.f32.gmra.mxu0 %v126
    %v194 = vpop.f32.mrf.mxu0
    %v195 = vadd.f32 %v121, %v194
    %v196 = vpop.f32.mrf.mxu0
    %197 = vdwg.mxu0
    %v198 = vmax.f32 %v195, 0.0
    %v199 = vld [vmem:[%s4] sm:$0xff]
    %v200 = vld [vmem:[%s4 + $0x8] sm:$0xff]
    %v201 = vld [vmem:[%s4 + $0x10] sm:$0xff]
    %v202 = vld [vmem:[%s4 + $0x18] sm:$0xff]
    %v203 = vld [vmem:[%s4 + $0x20] sm:$0xff]
    %v204 = vld [vmem:[%s4 + $0x28] sm:$0xff]
    %v205 = vld [vmem:[%s4 + $0x30] sm:$0xff]
    %v206 = vld [vmem:[%s4 + $0x38] sm:$0xff]
    %v207 = vlaneseq
    %v208 = vshrl.u32 %v207, 7
    %v209 = vsub.s32 0, %v208
    %v210 = vrot.slane %v24, %v209
    %vm211 = vcmask 523264
    %v213 = vsel %vm211, %v198, 0
    %215 = vmatprep.subr.mxu0 0.0
    %216 = vmatpush1.msra.mxu0 0.0
    %217 = vmatprep.subr.mxu0 0.0
    %218 = vmatpush1.msra.mxu0 0.0
    %219 = vmatprep.subr.mxu0 0.0
    %220 = vmatpush1.msra.mxu0 0.0
    %221 = vmatprep.subr.mxu0 0.0
    %222 = vmatpush1.msra.mxu0 0.0
    %223 = vmatprep.subr.mxu0 0.0
    %224 = vmatpush1.msra.mxu0 0.0
    %225 = vmatprep.subr.mxu0 0.0
    %226 = vmatpush1.msra.mxu0 0.0
    %227 = vmatprep.subr.mxu0 0.0
    %228 = vmatpush1.msra.mxu0 0.0
    %229 = vmatprep.subr.mxu0 0.0
    %230 = vmatpush1.msra.mxu0 0.0
    %231 = vmatprep.subr.mxu0 0.0
    %232 = vmatpush1.msra.mxu0 %v206
    %233 = vmatprep.subr.mxu0 0.0
    %234 = vmatpush1.msra.mxu0 %v205
    %235 = vmatprep.subr.mxu0 0.0
    %236 = vmatpush1.msra.mxu0 %v204
    %237 = vmatprep.subr.mxu0 0.0
    %238 = vmatpush1.msra.mxu0 %v203
    %239 = vmatprep.subr.mxu0 0.0
    %240 = vmatpush1.msra.mxu0 %v202
    %241 = vmatprep.subr.mxu0 0.0
    %242 = vmatpush1.msra.mxu0 %v201
    %243 = vmatprep.subr.mxu0 0.0
    %244 = vmatpush1.msra.mxu0 %v200
    %245 = vmatprep.subr.mxu0 0.0
    %246 = vmatpush1.msra.mxu0 %v199
    %247 = vmatprep.subr.mxu0 0.0
    %248 = vmatpush2.msra.mxu0 0.0
    %249 = vmatprep.subr.mxu0 0.0
    %250 = vmatpush2.msra.mxu0 0.0
    %251 = vmatprep.subr.mxu0 0.0
    %252 = vmatpush2.msra.mxu0 0.0
    %253 = vmatprep.subr.mxu0 0.0
    %254 = vmatpush2.msra.mxu0 0.0
    %255 = vmatprep.subr.mxu0 0.0
    %256 = vmatpush2.msra.mxu0 0.0
    %257 = vmatprep.subr.mxu0 0.0
    %258 = vmatpush2.msra.mxu0 0.0
    %259 = vmatprep.subr.mxu0 0.0
    %260 = vmatpush2.msra.mxu0 0.0
    %261 = vmatprep.subr.mxu0 0.0
    %262 = vmatpush2.msra.mxu0 0.0
    %263 = vmatprep.subr.mxu0 0.0
    %264 = vmatpush2.msra.mxu0 0.0
    %265 = vmatprep.subr.mxu0 0.0
    %266 = vmatpush2.msra.mxu0 0.0
    %267 = vmatprep.subr.mxu0 0.0
    %268 = vmatpush2.msra.mxu0 0.0
    %269 = vmatprep.subr.mxu0 0.0
    %270 = vmatpush2.msra.mxu0 0.0
    %271 = vmatprep.subr.mxu0 0.0
    %272 = vmatpush2.msra.mxu0 0.0
    %273 = vmatprep.subr.mxu0 0.0
    %274 = vmatpush2.msra.mxu0 0.0
    %275 = vmatprep.subr.mxu0 0.0
    %276 = vmatpush2.msra.mxu0 0.0
    %277 = vmatprep.subr.mxu0 0.0
    %278 = vmatpush2.msra.mxu0 0.0
    %279 = vmatprep.mubr.f32.mxu0 0.0
    %280 = vmatmul.mubr.f32.gmra.mxu0 %v213
    %v281 = vpop.f32.mrf.mxu0
    %v282 = vadd.f32 %v210, %v281
    %v283 = vpop.f32.mrf.mxu0
    %284 = vdwg.mxu0
    %v285 = vmax.f32 %v282, 0.0
    %287 = vset.pattern.permute.xlu0 0
    %288 = vperm.xlu0 %287, %v26
    %v289 = vpop.permute.xlu0 %288
    %vm291 = vcmask 261120
    %v293 = vsel %vm291, %v25, 0
    %v296 = vsel %vm291, %v285, 0
    %298 = vmatprep.subr.mxu0 0.0
    %299 = vmatpush1.xpose.msra.mxu0 0.0
    %300 = vmatprep.subr.mxu0 0.0
    %301 = vmatpush1.xpose.msra.mxu0 0.0
    %302 = vmatprep.subr.mxu0 0.0
    %303 = vmatpush1.xpose.msra.mxu0 0.0
    %304 = vmatprep.subr.mxu0 0.0
    %305 = vmatpush1.xpose.msra.mxu0 0.0
    %306 = vmatprep.subr.mxu0 0.0
    %307 = vmatpush1.xpose.msra.mxu0 0.0
    %308 = vmatprep.subr.mxu0 0.0
    %309 = vmatpush1.xpose.msra.mxu0 0.0
    %310 = vmatprep.subr.mxu0 0.0
    %311 = vmatpush1.xpose.msra.mxu0 0.0
    %312 = vmatprep.subr.mxu0 0.0
    %313 = vmatpush1.xpose.msra.mxu0 0.0
    %314 = vmatprep.subr.mxu0 0.0
    %315 = vmatpush1.xpose.msra.mxu0 0.0
    %316 = vmatprep.subr.mxu0 0.0
    %317 = vmatpush1.xpose.msra.mxu0 0.0
    %318 = vmatprep.subr.mxu0 0.0
    %319 = vmatpush1.xpose.msra.mxu0 0.0
    %320 = vmatprep.subr.mxu0 0.0
    %321 = vmatpush1.xpose.msra.mxu0 0.0
    %322 = vmatprep.subr.mxu0 0.0
    %323 = vmatpush1.xpose.msra.mxu0 0.0
    %324 = vmatprep.subr.mxu0 0.0
    %325 = vmatpush1.xpose.msra.mxu0 0.0
    %326 = vmatprep.subr.mxu0 0.0
    %327 = vmatpush1.xpose.msra.mxu0 0.0
    %328 = vmatprep.subr.mxu0 0.0
    %329 = vmatpush1.xpose.msra.mxu0 %v296
    %330 = vmatprep.subr.mxu0 0.0
    %331 = vmatpush2.xpose.msra.mxu0 0.0
    %332 = vmatprep.subr.mxu0 0.0
    %333 = vmatpush2.xpose.msra.mxu0 0.0
    %334 = vmatprep.subr.mxu0 0.0
    %335 = vmatpush2.xpose.msra.mxu0 0.0
    %336 = vmatprep.subr.mxu0 0.0
    %337 = vmatpush2.xpose.msra.mxu0 0.0
    %338 = vmatprep.subr.mxu0 0.0
    %339 = vmatpush2.xpose.msra.mxu0 0.0
    %340 = vmatprep.subr.mxu0 0.0
    %341 = vmatpush2.xpose.msra.mxu0 0.0
    %342 = vmatprep.subr.mxu0 0.0
    %343 = vmatpush2.xpose.msra.mxu0 0.0
    %344 = vmatprep.subr.mxu0 0.0
    %345 = vmatpush2.xpose.msra.mxu0 0.0
    %346 = vmatprep.subr.mxu0 0.0
    %347 = vmatpush2.xpose.msra.mxu0 0.0
    %348 = vmatprep.subr.mxu0 0.0
    %349 = vmatpush2.xpose.msra.mxu0 0.0
    %350 = vmatprep.subr.mxu0 0.0
    %351 = vmatpush2.xpose.msra.mxu0 0.0
    %352 = vmatprep.subr.mxu0 0.0
    %353 = vmatpush2.xpose.msra.mxu0 0.0
    %354 = vmatprep.subr.mxu0 0.0
    %355 = vmatpush2.xpose.msra.mxu0 0.0
    %356 = vmatprep.subr.mxu0 0.0
    %357 = vmatpush2.xpose.msra.mxu0 0.0
    %358 = vmatprep.subr.mxu0 0.0
    %359 = vmatpush2.xpose.msra.mxu0 0.0
    %360 = vmatprep.subr.mxu0 0.0
    %361 = vmatpush2.xpose.msra.mxu0 0.0
    %362 = vmatprep.mubr.f32.mxu0 0.0
    %363 = vmatmul.mubr.f32.gmra.mxu0 %v293
    %v364 = vpop.f32.mrf.mxu0
    %v365 = vadd.f32 %v289, %v364
    %v366 = vpop.f32.mrf.mxu0
    %367 = vdwg.mxu0
    %v368 = vxor.u32 %v365, 2147483648
    %v369 = vmul.f32 %v368, 1.442695
    %v370 = vpow.pop %v369
    %v371 = vadd.f32 %v370, 1.0
    %v372 = vrcp.pop %v371
    %v373 = vmul.f32 1.0, %v372
    %vm374 = vcmask 57344
    %375 = vst.msk [vmem:[#allocation2] sm:$0x1] %vm374, %v373
    // Predicated region
    $region26: #{discriminator_forward.1} parent=1 // pred_check
      _
    $region27: #{discriminator_forward.1} parent=1 // pred_check_branch
      %377 = sbr.rel (0) target = $region29
    $region28: #{discriminator_forward.1} parent=1 // pred_region
      %s379 = ssub.s32 16, 16
      %380 = vsyncadd [#allocation3], %s379
      %s382 = sshll.u32 [#allocation2], 4
      %s383 = int_to_ptr.vmem [resolvable:$true] %s382
      %385 = dma.vmem_to_hbm [thread:$0]  %s383, 16, %s6, [#allocation3]
    $region29: #{discriminator_forward.1} parent=1 // pred_fallthru
      _
    // Predicated region
    $region30: #{discriminator_forward.1} parent=1 // pred_check
      _
    $region31: #{discriminator_forward.1} parent=1 // pred_check_branch
      %387 = sbr.rel (0) target = $region33
    $region32: #{discriminator_forward.1} parent=1 // pred_region
      %388 = dma.done [#allocation3], 16
    $region33: #{discriminator_forward.1} parent=1 // pred_fallthru
      _
    %389 = vsyncpa [#allocation3], 1

</llo_original>
